<compile_context>
chip_gen: v6e
topology: v6e:2x2x1
jax: 0.10.0
libtpu: 0.0.40
codegen_flags: <defaults>
</compile_context>

<pallas_src>
import numpy as np
import jax
import jax.numpy as jnp
from jax import lax
from jax.experimental import pallas as pl
from jax.experimental.pallas import tpu as pltpu

EPS = 1e-5
K = 5        # conv kernel size
STRIDE = 3   # conv stride
PAD = 2      # conv padding
C = 16       # channels of both conv layers


def _conv_out_len(L):
    return (L + 2 * PAD - K) // STRIDE + 1


# ----------------------------- fused Pallas kernel ---------------------------

def fused_cnn_kernel(x_ref, g1_ref, g2_ref, wh1_ref, wfc2_ref, o_ref):
    """Whole network = 4 MXU matmuls; every intermediate lives in vregs/VMEM.

    All operands are bf16; accumulation is f32.  Biases/BN shifts are carried
    by a "ones" column chained through every layer, so there are no separate
    bias inputs.  ReLU commutes with max, so Conv->BN->ReLU->MaxPool becomes
    (folded conv) -> max-of-halves -> ReLU.
    """
    # conv1 + BN1 (folded): (B, L+1) @ (L+1, 2*(C*L2+1))
    y1 = jnp.dot(x_ref[...], g1_ref[...], preferred_element_type=jnp.float32)
    half = y1.shape[1] // 2
    y1p = jnp.maximum(jnp.maximum(y1[:, :half], y1[:, half:]), 0.0)

    # conv2 + BN2 (folded): (B, C*L2+1) @ (C*L2+1, C*L3+1)
    y2 = jnp.dot(y1p.astype(jnp.bfloat16), g2_ref[...],
                 preferred_element_type=jnp.float32)
    y2 = jnp.maximum(y2, 0.0)

    # AdaptiveAvgPool1d(1) + fc1 (folded): (B, C*L3+1) @ (C*L3+1, 17)
    h = jnp.dot(y2.astype(jnp.bfloat16), wh1_ref[...],
                preferred_element_type=jnp.float32)
    h = jnp.maximum(h, 0.0)

    # fc2 (+bias folded): (B, 17) @ (17, NC)
    o_ref[...] = jnp.dot(h.astype(jnp.bfloat16), wfc2_ref[...],
                         preferred_element_type=jnp.float32)


_VMEM_SPEC = pl.BlockSpec(memory_space=pltpu.MemorySpace.VMEM)


def _forward_impl(x_ncl, g1, g2, wh1, wfc2):
    B = x_ncl.shape[0]
    L = x_ncl.shape[-1]
    NC = wfc2.shape[-1]

    # Squeeze C_in = 1 and append the ones column that carries all folded
    # biases; cast to bf16 for the MXU (halves the input DMA bytes too).
    x = x_ncl.reshape(B, L).astype(jnp.bfloat16)
    x_aug = jnp.concatenate([x, jnp.ones((B, 1), jnp.bfloat16)], axis=1)

    args = (x_aug, g1, g2, wh1, wfc2)
    flops = 2 * B * sum(int(w.shape[0]) * int(w.shape[1])
                        for w in (g1, g2, wh1, wfc2))
    bytes_accessed = sum(int(a.size) * a.dtype.itemsize for a in args) \
        + B * NC * 4

    return pl.pallas_call(
        fused_cnn_kernel,
        out_shape=jax.ShapeDtypeStruct((B, NC), jnp.float32),
        in_specs=[_VMEM_SPEC] * len(args),
        out_specs=_VMEM_SPEC,
        cost_estimate=pl.CostEstimate(flops=flops, transcendentals=0,
                                      bytes_accessed=bytes_accessed),
    )(*args)


model_forward_pallas = jax.jit(_forward_impl)


# --------------------- one-time host-side weight preparation ------------------

def prepare_model(params, L):
    """Fold the whole network into four bf16 matmul matrices (pure numpy).

    Runs ONCE per set of weights, entirely outside jit, so nothing here is on
    the per-call path.  BatchNorm (eval-mode running stats), conv biases, the
    MaxPool column ordering, AdaptiveAvgPool1d(1) and the fc biases are all
    baked into the matrices; biases travel through a chained "ones" column.
    """
    p = {k: np.asarray(v, dtype=np.float32) for k, v in params.items()}
    L1 = _conv_out_len(L)
    L2 = L1 // 2                       # MaxPool1d(2), floor mode
    L3 = _conv_out_len(L2)
    NC = p['fc2_w'].shape[0]
    CL2, CL3 = C * L2, C * L3
    H1 = CL2 + 1                       # half width incl. ones-passthrough col

    # Fold BatchNorm (eval mode) into conv weights / additive shifts.
    s1 = p['bn1_gamma'] / np.sqrt(p['bn1_var'] + EPS)
    t1 = (p['conv1_b'] - p['bn1_mean']) * s1 + p['bn1_beta']
    s2 = p['bn2_gamma'] / np.sqrt(p['bn2_var'] + EPS)
    t2 = (p['conv2_b'] - p['bn2_mean']) * s2 + p['bn2_beta']
    w1f = p['conv1_w'][:, 0, :] * s1[:, None]             # (C, K)
    w2f = p['conv2_w'] * s2[:, None, None]                 # (C, C, K)

    # conv1 as a banded matrix; columns ordered [parity | channel | position]
    # so MaxPool1d(2) is a max of the two halves.  Row L is the bias row; the
    # last column of each half is the ones passthrough.
    g1 = np.zeros((L + 1, 2 * H1), np.float32)
    ch_off = np.arange(C) * L2
    for parity in (0, 1):
        base = parity * H1
        for m in range(L2):
            l = 2 * m + parity
            for t in range(K):
                i = STRIDE * l + t - PAD        # zero-padding -> skip OOB rows
                if 0 <= i < L:
                    g1[i, base + ch_off + m] = w1f[:, t]
        g1[L, base:base + CL2] = np.repeat(t1, L2)
        g1[L, base + CL2] = 1.0

    # conv2 as a banded matrix on the [channel | position] layout.
    g2 = np.zeros((H1, CL3 + 1), np.float32)
    for l3 in range(L3):
        for t in range(K):
            m = STRIDE * l3 + t - PAD
            if 0 <= m < L2:
                rows = np.arange(C) * L2 + m    # input channel ci
                cols = np.arange(C) * L3 + l3   # output channel co
                g2[np.ix_(rows, cols)] = w2f[:, :, t].T   # (ci, co)
    g2[CL2, :CL3] = np.repeat(t2, L3)
    g2[CL2, CL3] = 1.0

    # AdaptiveAvgPool1d(1) folded into fc1 (+bias, + ones passthrough for fc2).
    wh1 = np.zeros((CL3 + 1, C + 1), np.float32)
    wh1[:CL3, :C] = np.repeat(p['fc1_w'].T, L3, axis=0) / L3
    wh1[CL3, :C] = p['fc1_b']
    wh1[CL3, C] = 1.0

    # fc2 (+bias).
    wfc2 = np.zeros((C + 1, NC), np.float32)
    wfc2[:C, :] = p['fc2_w'].T
    wfc2[C, :] = p['fc2_b']

    to_dev = lambda a: jnp.asarray(a, dtype=jnp.bfloat16)
    return to_dev(g1), to_dev(g2), to_dev(wh1), to_dev(wfc2)


# ------------------------------ pure-JAX reference ----------------------------

def model_forward_reference(x, p):
    hi = lax.Precision.HIGHEST

    def bn(y, g, b, m, v):
        return (y - m[None, :, None]) / jnp.sqrt(v[None, :, None] + EPS) \
            * g[None, :, None] + b[None, :, None]

    y = lax.conv_general_dilated(x, p['conv1_w'], (STRIDE,), [(PAD, PAD)],
                                 dimension_numbers=('NCH', 'OIH', 'NCH'),
                                 precision=hi) + p['conv1_b'][None, :, None]
    y = jnp.maximum(bn(y, p['bn1_gamma'], p['bn1_beta'],
                       p['bn1_mean'], p['bn1_var']), 0.0)
    B, Ch, L1 = y.shape
    y = y[:, :, :2 * (L1 // 2)].reshape(B, Ch, L1 // 2, 2).max(axis=-1)
    y = lax.conv_general_dilated(y, p['conv2_w'], (STRIDE,), [(PAD, PAD)],
                                 dimension_numbers=('NCH', 'OIH', 'NCH'),
                                 precision=hi) + p['conv2_b'][None, :, None]
    y = jnp.maximum(bn(y, p['bn2_gamma'], p['bn2_beta'],
                       p['bn2_mean'], p['bn2_var']), 0.0)
    y = y.mean(axis=-1)                                               # (B, 16)
    h = jnp.maximum(jnp.dot(y, p['fc1_w'].T, precision=hi) + p['fc1_b'], 0.0)
    return jnp.dot(h, p['fc2_w'].T, precision=hi) + p['fc2_b']


# ---------------------------------- parameters ---------------------------------

def init_params(key, num_classes):
    ks = jax.random.split(key, 16)

    def u(k, shape, fan_in):
        bound = 1.0 / np.sqrt(fan_in)
        return jax.random.uniform(k, shape, jnp.float32, -bound, bound)

    return dict(
        conv1_w=u(ks[0], (16, 1, 5), 5),   conv1_b=u(ks[1], (16,), 5),
        conv2_w=u(ks[2], (16, 16, 5), 80), conv2_b=u(ks[3], (16,), 80),
        fc1_w=u(ks[4], (16, 16), 16),      fc1_b=u(ks[5], (16,), 16),
        fc2_w=u(ks[6], (num_classes, 16), 16), fc2_b=u(ks[7], (num_classes,), 16),
        bn1_gamma=jax.random.uniform(ks[8], (16,), jnp.float32, 0.5, 1.5),
        bn1_beta=0.1 * jax.random.normal(ks[9], (16,), jnp.float32),
        bn1_mean=0.1 * jax.random.normal(ks[10], (16,), jnp.float32),
        bn1_var=jax.random.uniform(ks[11], (16,), jnp.float32, 0.5, 1.5),
        bn2_gamma=jax.random.uniform(ks[12], (16,), jnp.float32, 0.5, 1.5),
        bn2_beta=0.1 * jax.random.normal(ks[13], (16,), jnp.float32),
        bn2_mean=0.1 * jax.random.normal(ks[14], (16,), jnp.float32),
        bn2_var=jax.random.uniform(ks[15], (16,), jnp.float32, 0.5, 1.5),
    )


# ------------------------------------- main -------------------------------------

if __name__ == "__main__":
    NUM_CLASSES = 2          # ecg-two-classes
    B, L = 8, 96             # small ECG-like input; (B, 1, L) as in ToTensorDataset

    key = jax.random.PRNGKey(0)
    kx, kp = jax.random.split(key)
    x = jax.random.normal(kx, (B, 1, L), jnp.float32)
    params = init_params(kp, NUM_CLASSES)

    prepared = prepare_model(params, L)      # one-time, off the per-call path
    out = jax.block_until_ready(model_forward_pallas(x, *prepared))
    ref = jax.block_until_ready(model_forward_reference(x, params))

    assert out.shape == (B, NUM_CLASSES), out.shape
    np.testing.assert_allclose(np.asarray(out), np.asarray(ref),
                               rtol=1e-2, atol=1e-2)

    print("KERNEL_OK")
</pallas_src>

<mosaic_0001>
module attributes {stable_mosaic.version = 11 : i64} {
  func.func @fused_cnn_kernel(%arg0: memref<8x97xbf16, #tpu.memory_space<vmem>>, %arg1: memref<97x514xbf16, #tpu.memory_space<vmem>>, %arg2: memref<257x97xbf16, #tpu.memory_space<vmem>>, %arg3: memref<97x17xbf16, #tpu.memory_space<vmem>>, %arg4: memref<17x2xbf16, #tpu.memory_space<vmem>>, %arg5: memref<8x2xf32, #tpu.memory_space<vmem>>) attributes {dimension_semantics = [], scalar_prefetch = 0 : i64, scratch_operands = 0 : i64, tpu.core_type = #tpu.core_type<tc>} {
    %c0 = arith.constant 0 : index
    %c0_0 = arith.constant 0 : index
    %0 = vector.load %arg0[%c0, %c0_0] : memref<8x97xbf16, #tpu.memory_space<vmem>>, vector<8x97xbf16>
    %c0_1 = arith.constant 0 : index
    %c0_2 = arith.constant 0 : index
    %1 = vector.load %arg1[%c0_1, %c0_2] : memref<97x514xbf16, #tpu.memory_space<vmem>>, vector<97x514xbf16>
    %cst = arith.constant dense<0.000000e+00> : vector<8x514xf32>
    %2 = tpu.matmul %0, %1, %cst {dimension_numbers = #tpu.dot_dimension_numbers<[1], [0], [0], [1], [0, 0, 1, 1], [], []>} : vector<8x97xbf16>, vector<97x514xbf16>, vector<8x514xf32> -> vector<8x514xf32>
    %3 = vector.extract_strided_slice %2 {offsets = [0, 0], sizes = [8, 257], strides = [1, 1]} : vector<8x514xf32> to vector<8x257xf32>
    %4 = vector.extract_strided_slice %2 {offsets = [0, 257], sizes = [8, 257], strides = [1, 1]} : vector<8x514xf32> to vector<8x257xf32>
    %5 = arith.maximumf %3, %4 : vector<8x257xf32>
    %cst_3 = arith.constant 0.000000e+00 : f32
    %6 = vector.broadcast %cst_3 : f32 to vector<8x257xf32>
    %7 = arith.maximumf %5, %6 : vector<8x257xf32>
    %8 = arith.truncf %7 : vector<8x257xf32> to vector<8x257xbf16>
    %c0_4 = arith.constant 0 : index
    %c0_5 = arith.constant 0 : index
    %9 = vector.load %arg2[%c0_4, %c0_5] : memref<257x97xbf16, #tpu.memory_space<vmem>>, vector<257x97xbf16>
    %cst_6 = arith.constant dense<0.000000e+00> : vector<8x97xf32>
    %10 = tpu.matmul %8, %9, %cst_6 {dimension_numbers = #tpu.dot_dimension_numbers<[1], [0], [0], [1], [0, 0, 1, 1], [], []>} : vector<8x257xbf16>, vector<257x97xbf16>, vector<8x97xf32> -> vector<8x97xf32>
    %cst_7 = arith.constant 0.000000e+00 : f32
    %11 = vector.broadcast %cst_7 : f32 to vector<8x97xf32>
    %12 = arith.maximumf %10, %11 : vector<8x97xf32>
    %13 = arith.truncf %12 : vector<8x97xf32> to vector<8x97xbf16>
    %c0_8 = arith.constant 0 : index
    %c0_9 = arith.constant 0 : index
    %14 = vector.load %arg3[%c0_8, %c0_9] : memref<97x17xbf16, #tpu.memory_space<vmem>>, vector<97x17xbf16>
    %cst_10 = arith.constant dense<0.000000e+00> : vector<8x17xf32>
    %15 = tpu.matmul %13, %14, %cst_10 {dimension_numbers = #tpu.dot_dimension_numbers<[1], [0], [0], [1], [0, 0, 1, 1], [], []>} : vector<8x97xbf16>, vector<97x17xbf16>, vector<8x17xf32> -> vector<8x17xf32>
    %cst_11 = arith.constant 0.000000e+00 : f32
    %16 = vector.broadcast %cst_11 : f32 to vector<8x17xf32>
    %17 = arith.maximumf %15, %16 : vector<8x17xf32>
    %18 = arith.truncf %17 : vector<8x17xf32> to vector<8x17xbf16>
    %c0_12 = arith.constant 0 : index
    %c0_13 = arith.constant 0 : index
    %19 = vector.load %arg4[%c0_12, %c0_13] : memref<17x2xbf16, #tpu.memory_space<vmem>>, vector<17x2xbf16>
    %cst_14 = arith.constant dense<0.000000e+00> : vector<8x2xf32>
    %20 = tpu.matmul %18, %19, %cst_14 {dimension_numbers = #tpu.dot_dimension_numbers<[1], [0], [0], [1], [0, 0, 1, 1], [], []>} : vector<8x17xbf16>, vector<17x2xbf16>, vector<8x2xf32> -> vector<8x2xf32>
    %c0_15 = arith.constant 0 : index
    %c0_16 = arith.constant 0 : index
    %21 = vector.load %arg5[%c0_15, %c0_16] : memref<8x2xf32, #tpu.memory_space<vmem>>, vector<8x2xf32>
    tpu.vector_store %arg5[%c0_15, %c0_16], %20 {strides = array<i32>} : memref<8x2xf32, #tpu.memory_space<vmem>>, vector<8x2xf32>,
    return
  }
}

</mosaic_0001>

<llo_original>
// kernel: _forward_impl.1
$region0: #{_forward_impl.1}
  #allocation0 [shape = 'u32[]', space=smem, size = 0x4, offset = 0x4, fixed_abs, tag = 'smem constant byte address 0x4 - core index']
  #allocation1 [shape = 'u32[144,128]{1,0:T(1,128)}', space=vmem, size = 0x12000, scoped, tag = 'internal scratch']
  %s0 = inlined_call_operand.vmem [shape: bf16[8,97], index: 0, kind: input, shape index: {}]
  %s1 = inlined_call_operand.hbm [shape: bf16[97,514], index: 1, kind: input, shape index: {}]
  %s2 = inlined_call_operand.hbm [shape: bf16[257,97], index: 2, kind: input, shape index: {}]
  %s3 = inlined_call_operand.vmem [shape: bf16[97,17], index: 3, kind: input, shape index: {}]
  %s4 = inlined_call_operand.vmem [shape: bf16[17,2], index: 4, kind: input, shape index: {}]
  %s5 = inlined_call_operand.vmem [shape: f32[8,2], index: 5, kind: output, shape index: {}]
  %s6 = sld [smem:[#allocation0]]
  $region38: #{_forward_impl.1} parent=0
    _
  %s8 = ssub.s32 1, %s6
  %s9 = scalar_select 0, %s8, %s6
  $region1: #{_forward_impl.1} parent=0
    #allocation2 [shape = 'u8[133120]{0}', space=vmem, size = 0x20800, scoped, tag = 'input window, operand 1, single buffered']
    #allocation3 [shape = 's32[1]{0}', space=sflag, size = 0x4, scoped, tag = 'scoped memory for _forward_impl.1']
    #allocation4 [shape = 'u8[67584]{0}', space=vmem, size = 0x10800, scoped, tag = 'input window, operand 2, single buffered']
    #allocation5 [shape = 's32[1]{0}', space=sflag, size = 0x4, scoped, tag = 'scoped memory for _forward_impl.1']
    %10 = vsyncpa [#allocation3], 0
    %11 = vsyncpa [#allocation5], 0
    // Predicated region
    $region2: #{_forward_impl.1} parent=1 // pred_check
      _
    $region3: #{_forward_impl.1} parent=1 // pred_check_branch
      %13 = sbr.rel (0) target = $region5
    $region4: #{_forward_impl.1} parent=1 // pred_region
      _
    $region5: #{_forward_impl.1} parent=1 // pred_fallthru
      _
    // Predicated region
    $region6: #{_forward_impl.1} parent=1 // pred_check
      _
    $region7: #{_forward_impl.1} parent=1 // pred_check_branch
      %15 = sbr.rel (0) target = $region9
    $region8: #{_forward_impl.1} parent=1 // pred_region
      %s17 = ssub.s32 4160, 4160
      %18 = vsyncadd [#allocation3], %s17
      %s19 = sshll.u32 [#allocation2], 4
      %s20 = int_to_ptr.vmem [resolvable:$true] %s19
      %25 = dma.hbm_to_vmem [thread:$0]  %s1, 4160, %s20, [#allocation3], 320, 320, 20
    $region9: #{_forward_impl.1} parent=1 // pred_fallthru
      _
    // Predicated region
    $region10: #{_forward_impl.1} parent=1 // pred_check
      _
    $region11: #{_forward_impl.1} parent=1 // pred_check_branch
      %27 = sbr.rel (0) target = $region13
    $region12: #{_forward_impl.1} parent=1 // pred_region
      %s29 = ssub.s32 2112, 2112
      %30 = vsyncadd [#allocation5], %s29
      %s31 = sshll.u32 [#allocation4], 4
      %s32 = int_to_ptr.vmem [resolvable:$true] %s31
      %37 = dma.hbm_to_vmem [thread:$0]  %s2, 2112, %s32, [#allocation5], 64, 64, 4
    $region13: #{_forward_impl.1} parent=1 // pred_fallthru
      _
    // Predicated region
    $region14: #{_forward_impl.1} parent=1 // pred_check
      _
    $region15: #{_forward_impl.1} parent=1 // pred_check_branch
      %39 = sbr.rel (0) target = $region17
    $region16: #{_forward_impl.1} parent=1 // pred_region
      _
    $region17: #{_forward_impl.1} parent=1 // pred_fallthru
      _
    // Predicated region
    $region18: #{_forward_impl.1} parent=1 // pred_check
      _
    $region19: #{_forward_impl.1} parent=1 // pred_check_branch
      %41 = sbr.rel (0) target = $region21
    $region20: #{_forward_impl.1} parent=1 // pred_region
      _
    $region21: #{_forward_impl.1} parent=1 // pred_fallthru
      _
    // Predicated region
    $region22: #{_forward_impl.1} parent=1 // pred_check
      _
    $region23: #{_forward_impl.1} parent=1 // pred_check_branch
      %43 = sbr.rel (0) target = $region25
    $region24: #{_forward_impl.1} parent=1 // pred_region
      %44 = dma.done [#allocation3], 4160
    $region25: #{_forward_impl.1} parent=1 // pred_fallthru
      _
    // Predicated region
    $region26: #{_forward_impl.1} parent=1 // pred_check
      _
    $region27: #{_forward_impl.1} parent=1 // pred_check_branch
      %46 = sbr.rel (0) target = $region29
    $region28: #{_forward_impl.1} parent=1 // pred_region
      %47 = dma.done [#allocation5], 2112
    $region29: #{_forward_impl.1} parent=1 // pred_fallthru
      _
    %v49 = vld [vmem:[%s0] sm:$0xf]
    %v50 = vld [vmem:[#allocation2] sm:$0xff]
    %v51 = vld [vmem:[#allocation2 + $0x8] sm:$0xff]
    %v52 = vld [vmem:[#allocation2 + $0x10] sm:$0xf]
    %v53 = vld [vmem:[#allocation2 + $0x14] sm:$0xff]
    %v54 = vld [vmem:[#allocation2 + $0x1c] sm:$0xff]
    %v55 = vld [vmem:[#allocation2 + $0x24] sm:$0xf]
    %v56 = vld [vmem:[#allocation2 + $0x28] sm:$0xff]
    %v57 = vld [vmem:[#allocation2 + $0x30] sm:$0xff]
    %v58 = vld [vmem:[#allocation2 + $0x38] sm:$0xf]
    %v59 = vld [vmem:[#allocation2 + $0x3c] sm:$0xff]
    %v60 = vld [vmem:[#allocation2 + $0x44] sm:$0xff]
    %v61 = vld [vmem:[#allocation2 + $0x4c] sm:$0xf]
    %v62 = vld [vmem:[#allocation2 + $0x50] sm:$0xff]
    %v63 = vld [vmem:[#allocation2 + $0x58] sm:$0xff]
    %v64 = vld [vmem:[#allocation2 + $0x60] sm:$0xf]
    %v65 = vld [vmem:[#allocation2 + $0x64] sm:$0xff]
    %v66 = vld [vmem:[#allocation2 + $0x6c] sm:$0xff]
    %v67 = vld [vmem:[#allocation2 + $0x74] sm:$0xf]
    %v68 = vld [vmem:[#allocation2 + $0x78] sm:$0xff]
    %v69 = vld [vmem:[#allocation2 + $0x80] sm:$0xff]
    %v70 = vld [vmem:[#allocation2 + $0x88] sm:$0xf]
    %v71 = vld [vmem:[#allocation2 + $0x8c] sm:$0xff]
    %v72 = vld [vmem:[#allocation2 + $0x94] sm:$0xff]
    %v73 = vld [vmem:[#allocation2 + $0x9c] sm:$0xf]
    %v74 = vld [vmem:[#allocation2 + $0xa0] sm:$0xff]
    %v75 = vld [vmem:[#allocation2 + $0xa8] sm:$0xff]
    %v76 = vld [vmem:[#allocation2 + $0xb0] sm:$0xf]
    %v77 = vld [vmem:[#allocation2 + $0xb4] sm:$0xff]
    %v78 = vld [vmem:[#allocation2 + $0xbc] sm:$0xff]
    %v79 = vld [vmem:[#allocation2 + $0xc4] sm:$0xf]
    %v80 = vld [vmem:[#allocation2 + $0xc8] sm:$0xff]
    %v81 = vld [vmem:[#allocation2 + $0xd0] sm:$0xff]
    %v82 = vld [vmem:[#allocation2 + $0xd8] sm:$0xf]
    %v83 = vld [vmem:[#allocation2 + $0xdc] sm:$0xff]
    %v84 = vld [vmem:[#allocation2 + $0xe4] sm:$0xff]
    %v85 = vld [vmem:[#allocation2 + $0xec] sm:$0xf]
    %v86 = vld [vmem:[#allocation2 + $0xf0] sm:$0x11]
    %v87 = vld [vmem:[#allocation2 + $0xf8] sm:$0x11]
    %v88 = vld [vmem:[#allocation2 + $0x100] sm:$0x1]
    %v128 = vunpack.c.l.b16 %v50
    %v129 = vunpack.c.h.b16 %v50
    %v130 = vunpack.c.l.b16 %v51
    %v131 = vunpack.c.h.b16 %v51
    %v132 = vunpack.c.l.b16 %v52
    %v133 = vunpack.c.l.b16 %v53
    %v134 = vunpack.c.h.b16 %v53
    %v135 = vunpack.c.l.b16 %v54
    %v136 = vunpack.c.h.b16 %v54
    %v137 = vunpack.c.l.b16 %v55
    %v138 = vunpack.c.l.b16 %v56
    %v139 = vunpack.c.h.b16 %v56
    %v140 = vunpack.c.l.b16 %v57
    %v141 = vunpack.c.h.b16 %v57
    %v142 = vunpack.c.l.b16 %v58
    %v143 = vunpack.c.l.b16 %v59
    %v144 = vunpack.c.h.b16 %v59
    %v145 = vunpack.c.l.b16 %v60
    %v146 = vunpack.c.h.b16 %v60
    %v147 = vunpack.c.l.b16 %v61
    %v148 = vunpack.c.l.b16 %v62
    %v149 = vunpack.c.h.b16 %v62
    %v150 = vunpack.c.l.b16 %v63
    %v151 = vunpack.c.h.b16 %v63
    %v152 = vunpack.c.l.b16 %v64
    %v153 = vunpack.c.l.b16 %v65
    %v154 = vunpack.c.h.b16 %v65
    %v155 = vunpack.c.l.b16 %v66
    %v156 = vunpack.c.h.b16 %v66
    %v157 = vunpack.c.l.b16 %v67
    %v158 = vunpack.c.l.b16 %v68
    %v159 = vunpack.c.h.b16 %v68
    %v160 = vunpack.c.l.b16 %v69
    %v161 = vunpack.c.h.b16 %v69
    %v162 = vunpack.c.l.b16 %v70
    %v163 = vunpack.c.l.b16 %v71
    %v164 = vunpack.c.h.b16 %v71
    %v165 = vunpack.c.l.b16 %v72
    %v166 = vunpack.c.h.b16 %v72
    %v167 = vunpack.c.l.b16 %v73
    %v168 = vunpack.c.l.b16 %v74
    %v169 = vunpack.c.h.b16 %v74
    %v170 = vunpack.c.l.b16 %v75
    %v171 = vunpack.c.h.b16 %v75
    %v172 = vunpack.c.l.b16 %v76
    %v173 = vunpack.c.l.b16 %v77
    %v174 = vunpack.c.h.b16 %v77
    %v175 = vunpack.c.l.b16 %v78
    %v176 = vunpack.c.h.b16 %v78
    %v177 = vunpack.c.l.b16 %v79
    %v178 = vunpack.c.l.b16 %v80
    %v179 = vunpack.c.h.b16 %v80
    %v180 = vunpack.c.l.b16 %v81
    %v181 = vunpack.c.h.b16 %v81
    %v182 = vunpack.c.l.b16 %v82
    %v183 = vunpack.c.l.b16 %v83
    %v184 = vunpack.c.h.b16 %v83
    %v185 = vunpack.c.l.b16 %v84
    %v186 = vunpack.c.h.b16 %v84
    %v187 = vunpack.c.l.b16 %v85
    %v188 = vunpack.c.l.b16 %v86
    %v189 = vunpack.c.h.b16 %v86
    %v190 = vunpack.c.l.b16 %v87
    %v191 = vunpack.c.h.b16 %v87
    %v192 = vunpack.c.l.b16 %v88
    %v193 = vpack.c.b16 %v133, %v128
    %v194 = vpack.c.b16 %v134, %v129
    %v195 = vpack.c.b16 %v135, %v130
    %v196 = vpack.c.b16 %v136, %v131
    %v197 = vpack.c.b16 %v137, %v132
    %v198 = vpack.c.b16 %v143, %v138
    %v199 = vpack.c.b16 %v144, %v139
    %v200 = vpack.c.b16 %v145, %v140
    %v201 = vpack.c.b16 %v146, %v141
    %v202 = vpack.c.b16 %v147, %v142
    %v203 = vpack.c.b16 %v153, %v148
    %v204 = vpack.c.b16 %v154, %v149
    %v205 = vpack.c.b16 %v155, %v150
    %v206 = vpack.c.b16 %v156, %v151
    %v207 = vpack.c.b16 %v157, %v152
    %v208 = vpack.c.b16 %v163, %v158
    %v209 = vpack.c.b16 %v164, %v159
    %v210 = vpack.c.b16 %v165, %v160
    %v211 = vpack.c.b16 %v166, %v161
    %v212 = vpack.c.b16 %v167, %v162
    %v213 = vpack.c.b16 %v173, %v168
    %v214 = vpack.c.b16 %v174, %v169
    %v215 = vpack.c.b16 %v175, %v170
    %v216 = vpack.c.b16 %v176, %v171
    %v217 = vpack.c.b16 %v177, %v172
    %v218 = vpack.c.b16 %v183, %v178
    %v219 = vpack.c.b16 %v184, %v179
    %v220 = vpack.c.b16 %v185, %v180
    %v221 = vpack.c.b16 %v186, %v181
    %v222 = vpack.c.b16 %v187, %v182
    %v223 = vpack.c.b16 %v188, %v188
    %v224 = vpack.c.b16 %v189, %v189
    %v225 = vpack.c.b16 %v190, %v190
    %v226 = vpack.c.b16 %v191, %v191
    %v227 = vpack.c.b16 %v192, %v192
    %vm258 = vcmask 793600
    %v260 = vsel %vm258, %v49, 0
    %vm262 = vcmask 1040384
    %v263 = vsel 0, 4294967295, 65535
    %v264 = vsel %vm262, %v263, 0
    %v266 = vand.u32 %v223, %v264
    %v269 = vand.u32 %v224, %v264
    %v272 = vand.u32 %v225, %v264
    %v275 = vand.u32 %v226, %v264
    %v278 = vand.u32 %v227, %v264
    %280 = vmatprep.subr.bf16.mxu0 0
    %281 = vmatpush1.bf16.msra.mxu0 0
    %282 = vmatprep.subr.bf16.mxu0 %v269
    %283 = vmatpush1.bf16.msra.mxu0 %v266
    %284 = vmatprep.subr.bf16.mxu0 %v219
    %285 = vmatpush1.bf16.msra.mxu0 %v218
    %286 = vmatprep.subr.bf16.mxu0 %v214
    %287 = vmatpush1.bf16.msra.mxu0 %v213
    %288 = vmatprep.subr.bf16.mxu0 %v209
    %289 = vmatpush1.bf16.msra.mxu0 %v208
    %290 = vmatprep.subr.bf16.mxu0 %v204
    %291 = vmatpush1.bf16.msra.mxu0 %v203
    %292 = vmatprep.subr.bf16.mxu0 %v199
    %293 = vmatpush1.bf16.msra.mxu0 %v198
    %294 = vmatprep.subr.bf16.mxu0 %v194
    %295 = vmatpush1.bf16.msra.mxu0 %v193
    %296 = vmatprep.subr.bf16.mxu0 0
    %297 = vmatpush2.bf16.msra.mxu0 0
    %298 = vmatprep.subr.bf16.mxu0 0
    %299 = vmatpush2.bf16.msra.mxu0 0
    %300 = vmatprep.subr.bf16.mxu0 0
    %301 = vmatpush2.bf16.msra.mxu0 0
    %302 = vmatprep.subr.bf16.mxu0 0
    %303 = vmatpush2.bf16.msra.mxu0 0
    %304 = vmatprep.subr.bf16.mxu0 0
    %305 = vmatpush2.bf16.msra.mxu0 0
    %306 = vmatprep.subr.bf16.mxu0 0
    %307 = vmatpush2.bf16.msra.mxu0 0
    %308 = vmatprep.subr.bf16.mxu0 0
    %309 = vmatpush2.bf16.msra.mxu0 0
    %310 = vmatprep.subr.bf16.mxu0 0
    %311 = vmatpush2.bf16.msra.mxu0 0
    %312 = vmatprep.mubr.bf16.mxu0 0
    %313 = vmatmul.mubr.bf16.gmra.mxu0 %v260
    %v314 = vpop.f32.mrf.mxu0
    %v315 = vadd.f32 0.0, %v314
    %v316 = vpop.f32.mrf.mxu0
    %v317 = vadd.f32 0.0, %v316
    %v318 = vpop.f32.mrf.mxu0
    %v319 = vpop.f32.mrf.mxu0
    %320 = vdwg.mxu0
    %321 = vmatprep.subr.bf16.mxu0 0
    %322 = vmatpush1.bf16.msra.mxu0 0
    %323 = vmatprep.subr.bf16.mxu0 %v275
    %324 = vmatpush1.bf16.msra.mxu0 %v272
    %325 = vmatprep.subr.bf16.mxu0 %v221
    %326 = vmatpush1.bf16.msra.mxu0 %v220
    %327 = vmatprep.subr.bf16.mxu0 %v216
    %328 = vmatpush1.bf16.msra.mxu0 %v215
    %329 = vmatprep.subr.bf16.mxu0 %v211
    %330 = vmatpush1.bf16.msra.mxu0 %v210
    %331 = vmatprep.subr.bf16.mxu0 %v206
    %332 = vmatpush1.bf16.msra.mxu0 %v205
    %333 = vmatprep.subr.bf16.mxu0 %v201
    %334 = vmatpush1.bf16.msra.mxu0 %v200
    %335 = vmatprep.subr.bf16.mxu0 %v196
    %336 = vmatpush1.bf16.msra.mxu0 %v195
    %337 = vmatprep.subr.bf16.mxu0 0
    %338 = vmatpush2.bf16.msra.mxu0 0
    %339 = vmatprep.subr.bf16.mxu0 0
    %340 = vmatpush2.bf16.msra.mxu0 0
    %341 = vmatprep.subr.bf16.mxu0 0
    %342 = vmatpush2.bf16.msra.mxu0 0
    %343 = vmatprep.subr.bf16.mxu0 0
    %344 = vmatpush2.bf16.msra.mxu0 0
    %345 = vmatprep.subr.bf16.mxu0 0
    %346 = vmatpush2.bf16.msra.mxu0 0
    %347 = vmatprep.subr.bf16.mxu0 0
    %348 = vmatpush2.bf16.msra.mxu0 0
    %349 = vmatprep.subr.bf16.mxu0 0
    %350 = vmatpush2.bf16.msra.mxu0 0
    %351 = vmatprep.subr.bf16.mxu0 0
    %352 = vmatpush2.bf16.msra.mxu0 0
    %353 = vmatprep.mubr.bf16.mxu0 0
    %354 = vmatmul.mubr.bf16.gmra.mxu0 %v260
    %v355 = vpop.f32.mrf.mxu0
    %v356 = vadd.f32 0.0, %v355
    %v357 = vpop.f32.mrf.mxu0
    %v358 = vadd.f32 0.0, %v357
    %v359 = vpop.f32.mrf.mxu0
    %v360 = vpop.f32.mrf.mxu0
    %361 = vdwg.mxu0
    %362 = vmatprep.subr.bf16.mxu0 0
    %363 = vmatpush1.bf16.msra.mxu0 0
    %364 = vmatprep.subr.bf16.mxu0 0
    %365 = vmatpush1.bf16.msra.mxu0 %v278
    %366 = vmatprep.subr.bf16.mxu0 0
    %367 = vmatpush1.bf16.msra.mxu0 %v222
    %368 = vmatprep.subr.bf16.mxu0 0
    %369 = vmatpush1.bf16.msra.mxu0 %v217
    %370 = vmatprep.subr.bf16.mxu0 0
    %371 = vmatpush1.bf16.msra.mxu0 %v212
    %372 = vmatprep.subr.bf16.mxu0 0
    %373 = vmatpush1.bf16.msra.mxu0 %v207
    %374 = vmatprep.subr.bf16.mxu0 0
    %375 = vmatpush1.bf16.msra.mxu0 %v202
    %376 = vmatprep.subr.bf16.mxu0 0
    %377 = vmatpush1.bf16.msra.mxu0 %v197
    %378 = vmatprep.subr.bf16.mxu0 0
    %379 = vmatpush2.bf16.msra.mxu0 0
    %380 = vmatprep.subr.bf16.mxu0 0
    %381 = vmatpush2.bf16.msra.mxu0 0
    %382 = vmatprep.subr.bf16.mxu0 0
    %383 = vmatpush2.bf16.msra.mxu0 0
    %384 = vmatprep.subr.bf16.mxu0 0
    %385 = vmatpush2.bf16.msra.mxu0 0
    %386 = vmatprep.subr.bf16.mxu0 0
    %387 = vmatpush2.bf16.msra.mxu0 0
    %388 = vmatprep.subr.bf16.mxu0 0
    %389 = vmatpush2.bf16.msra.mxu0 0
    %390 = vmatprep.subr.bf16.mxu0 0
    %391 = vmatpush2.bf16.msra.mxu0 0
    %392 = vmatprep.subr.bf16.mxu0 0
    %393 = vmatpush2.bf16.msra.mxu0 0
    %394 = vmatprep.mubr.bf16.mxu0 0
    %395 = vmatmul.mubr.bf16.gmra.mxu0 %v260
    %v396 = vpop.f32.mrf.mxu0
    %v397 = vadd.f32 0.0, %v396
    %v398 = vpop.f32.mrf.mxu0
    %v399 = vpop.f32.mrf.mxu0
    %v400 = vpop.f32.mrf.mxu0
    %401 = vdwg.mxu0
    %405 = vrot.lane.b32.xlu0 %v356, 127
    %v406 = vpop.permute.xlu0 %405
    %407 = vrot.lane.b32.xlu0 %v358, 127
    %v408 = vpop.permute.xlu0 %407
    %409 = vrot.lane.b32.xlu0 %v397, 127
    %v410 = vpop.permute.xlu0 %409
    %vm411 = vcmask 1039360
    %v412 = vsel %vm411, %v406, %v408
    %v413 = vsel %vm411, %v408, %v410
    %v417 = vmax.f32 %v315, %v412
    %v418 = vmax.f32 %v317, %v413
    %v419 = vmax.f32 %v356, %v410
    %v420 = vmax.f32 %v417, 0.0
    %v421 = vmax.f32 %v418, 0.0
    %v422 = vmax.f32 %v419, 0.0
    %v423 = vpack.c.bf16 %v420, %v420
    %v424 = vpack.c.bf16 %v421, %v421
    %v425 = vpack.c.bf16 %v422, %v422
    %v426 = vld [vmem:[#allocation4] sm:$0xf]
    %v427 = vld [vmem:[#allocation4 + $0x4] sm:$0xf]
    %v428 = vld [vmem:[#allocation4 + $0x8] sm:$0xf]
    %v429 = vld [vmem:[#allocation4 + $0xc] sm:$0xf]
    %v430 = vld [vmem:[#allocation4 + $0x10] sm:$0xf]
    %v431 = vld [vmem:[#allocation4 + $0x14] sm:$0xf]
    %v432 = vld [vmem:[#allocation4 + $0x18] sm:$0xf]
    %v433 = vld [vmem:[#allocation4 + $0x1c] sm:$0xf]
    %v434 = vld [vmem:[#allocation4 + $0x20] sm:$0xf]
    %v435 = vld [vmem:[#allocation4 + $0x24] sm:$0xf]
    %v436 = vld [vmem:[#allocation4 + $0x28] sm:$0xf]
    %v437 = vld [vmem:[#allocation4 + $0x2c] sm:$0xf]
    %v438 = vld [vmem:[#allocation4 + $0x30] sm:$0xf]
    %v439 = vld [vmem:[#allocation4 + $0x34] sm:$0xf]
    %v440 = vld [vmem:[#allocation4 + $0x38] sm:$0xf]
    %v441 = vld [vmem:[#allocation4 + $0x3c] sm:$0xf]
    %v442 = vld [vmem:[#allocation4 + $0x40] sm:$0xf]
    %v443 = vld [vmem:[#allocation4 + $0x44] sm:$0xf]
    %v444 = vld [vmem:[#allocation4 + $0x48] sm:$0xf]
    %v445 = vld [vmem:[#allocation4 + $0x4c] sm:$0xf]
    %v446 = vld [vmem:[#allocation4 + $0x50] sm:$0xf]
    %v447 = vld [vmem:[#allocation4 + $0x54] sm:$0xf]
    %v448 = vld [vmem:[#allocation4 + $0x58] sm:$0xf]
    %v449 = vld [vmem:[#allocation4 + $0x5c] sm:$0xf]
    %v450 = vld [vmem:[#allocation4 + $0x60] sm:$0xf]
    %v451 = vld [vmem:[#allocation4 + $0x64] sm:$0xf]
    %v452 = vld [vmem:[#allocation4 + $0x68] sm:$0xf]
    %v453 = vld [vmem:[#allocation4 + $0x6c] sm:$0xf]
    %v454 = vld [vmem:[#allocation4 + $0x70] sm:$0xf]
    %v455 = vld [vmem:[#allocation4 + $0x74] sm:$0xf]
    %v456 = vld [vmem:[#allocation4 + $0x78] sm:$0xf]
    %v457 = vld [vmem:[#allocation4 + $0x7c] sm:$0xf]
    %v458 = vld [vmem:[#allocation4 + $0x80] sm:$0x1]
    %v492 = vunpack.c.l.b16 %v426
    %v493 = vunpack.c.l.b16 %v427
    %v494 = vunpack.c.l.b16 %v428
    %v495 = vunpack.c.l.b16 %v429
    %v496 = vunpack.c.l.b16 %v430
    %v497 = vunpack.c.l.b16 %v431
    %v498 = vunpack.c.l.b16 %v432
    %v499 = vunpack.c.l.b16 %v433
    %v500 = vunpack.c.l.b16 %v434
    %v501 = vunpack.c.l.b16 %v435
    %v502 = vunpack.c.l.b16 %v436
    %v503 = vunpack.c.l.b16 %v437
    %v504 = vunpack.c.l.b16 %v438
    %v505 = vunpack.c.l.b16 %v439
    %v506 = vunpack.c.l.b16 %v440
    %v507 = vunpack.c.l.b16 %v441
    %v508 = vunpack.c.l.b16 %v442
    %v509 = vunpack.c.l.b16 %v443
    %v510 = vunpack.c.l.b16 %v444
    %v511 = vunpack.c.l.b16 %v445
    %v512 = vunpack.c.l.b16 %v446
    %v513 = vunpack.c.l.b16 %v447
    %v514 = vunpack.c.l.b16 %v448
    %v515 = vunpack.c.l.b16 %v449
    %v516 = vunpack.c.l.b16 %v450
    %v517 = vunpack.c.l.b16 %v451
    %v518 = vunpack.c.l.b16 %v452
    %v519 = vunpack.c.l.b16 %v453
    %v520 = vunpack.c.l.b16 %v454
    %v521 = vunpack.c.l.b16 %v455
    %v522 = vunpack.c.l.b16 %v456
    %v523 = vunpack.c.l.b16 %v457
    %v524 = vunpack.c.l.b16 %v458
    %v525 = vpack.c.b16 %v493, %v492
    %v526 = vpack.c.b16 %v495, %v494
    %v527 = vpack.c.b16 %v497, %v496
    %v528 = vpack.c.b16 %v499, %v498
    %v529 = vpack.c.b16 %v501, %v500
    %v530 = vpack.c.b16 %v503, %v502
    %v531 = vpack.c.b16 %v505, %v504
    %v532 = vpack.c.b16 %v507, %v506
    %v533 = vpack.c.b16 %v509, %v508
    %v534 = vpack.c.b16 %v511, %v510
    %v535 = vpack.c.b16 %v513, %v512
    %v536 = vpack.c.b16 %v515, %v514
    %v537 = vpack.c.b16 %v517, %v516
    %v538 = vpack.c.b16 %v519, %v518
    %v539 = vpack.c.b16 %v521, %v520
    %v540 = vpack.c.b16 %v523, %v522
    %v541 = vpack.c.b16 %v524, %v524
    %vm558 = vcmask 7168
    %v560 = vsel %vm558, %v425, 0
    %v563 = vand.u32 %v541, %v264
    %565 = vmatprep.subr.bf16.mxu0 0
    %566 = vmatpush1.bf16.msra.mxu0 %v532
    %567 = vmatprep.subr.bf16.mxu0 0
    %568 = vmatpush1.bf16.msra.mxu0 %v531
    %569 = vmatprep.subr.bf16.mxu0 0
    %570 = vmatpush1.bf16.msra.mxu0 %v530
    %571 = vmatprep.subr.bf16.mxu0 0
    %572 = vmatpush1.bf16.msra.mxu0 %v529
    %573 = vmatprep.subr.bf16.mxu0 0
    %574 = vmatpush1.bf16.msra.mxu0 %v528
    %575 = vmatprep.subr.bf16.mxu0 0
    %576 = vmatpush1.bf16.msra.mxu0 %v527
    %577 = vmatprep.subr.bf16.mxu0 0
    %578 = vmatpush1.bf16.msra.mxu0 %v526
    %579 = vmatprep.subr.bf16.mxu0 0
    %580 = vmatpush1.bf16.msra.mxu0 %v525
    %581 = vmatprep.subr.bf16.mxu0 0
    %582 = vmatpush2.bf16.msra.mxu0 %v540
    %583 = vmatprep.subr.bf16.mxu0 0
    %584 = vmatpush2.bf16.msra.mxu0 %v539
    %585 = vmatprep.subr.bf16.mxu0 0
    %586 = vmatpush2.bf16.msra.mxu0 %v538
    %587 = vmatprep.subr.bf16.mxu0 0
    %588 = vmatpush2.bf16.msra.mxu0 %v537
    %589 = vmatprep.subr.bf16.mxu0 0
    %590 = vmatpush2.bf16.msra.mxu0 %v536
    %591 = vmatprep.subr.bf16.mxu0 0
    %592 = vmatpush2.bf16.msra.mxu0 %v535
    %593 = vmatprep.subr.bf16.mxu0 0
    %594 = vmatpush2.bf16.msra.mxu0 %v534
    %595 = vmatprep.subr.bf16.mxu0 0
    %596 = vmatpush2.bf16.msra.mxu0 %v533
    %597 = vmatprep.mubr.bf16.mxu0 %v424
    %598 = vmatmul.mubr.bf16.gmra.mxu0 %v423
    %v599 = vpop.f32.mrf.mxu0
    %v600 = vadd.f32 0.0, %v599
    %v601 = vpop.f32.mrf.mxu0
    %v602 = vpop.f32.mrf.mxu0
    %v603 = vpop.f32.mrf.mxu0
    %604 = vdwg.mxu0
    %605 = vmatprep.subr.bf16.mxu0 0
    %606 = vmatpush1.bf16.msra.mxu0 0
    %607 = vmatprep.subr.bf16.mxu0 0
    %608 = vmatpush1.bf16.msra.mxu0 0
    %609 = vmatprep.subr.bf16.mxu0 0
    %610 = vmatpush1.bf16.msra.mxu0 0
    %611 = vmatprep.subr.bf16.mxu0 0
    %612 = vmatpush1.bf16.msra.mxu0 0
    %613 = vmatprep.subr.bf16.mxu0 0
    %614 = vmatpush1.bf16.msra.mxu0 0
    %615 = vmatprep.subr.bf16.mxu0 0
    %616 = vmatpush1.bf16.msra.mxu0 0
    %617 = vmatprep.subr.bf16.mxu0 0
    %618 = vmatpush1.bf16.msra.mxu0 0
    %619 = vmatprep.subr.bf16.mxu0 0
    %620 = vmatpush1.bf16.msra.mxu0 %v563
    %621 = vmatprep.subr.bf16.mxu0 0
    %622 = vmatpush2.bf16.msra.mxu0 0
    %623 = vmatprep.subr.bf16.mxu0 0
    %624 = vmatpush2.bf16.msra.mxu0 0
    %625 = vmatprep.subr.bf16.mxu0 0
    %626 = vmatpush2.bf16.msra.mxu0 0
    %627 = vmatprep.subr.bf16.mxu0 0
    %628 = vmatpush2.bf16.msra.mxu0 0
    %629 = vmatprep.subr.bf16.mxu0 0
    %630 = vmatpush2.bf16.msra.mxu0 0
    %631 = vmatprep.subr.bf16.mxu0 0
    %632 = vmatpush2.bf16.msra.mxu0 0
    %633 = vmatprep.subr.bf16.mxu0 0
    %634 = vmatpush2.bf16.msra.mxu0 0
    %635 = vmatprep.subr.bf16.mxu0 0
    %636 = vmatpush2.bf16.msra.mxu0 0
    %637 = vmatprep.mubr.bf16.mxu0 0
    %638 = vmatmul.mubr.bf16.gmra.mxu0 %v560
    %v639 = vpop.f32.mrf.mxu0
    %v640 = vadd.f32 %v600, %v639
    %v641 = vpop.f32.mrf.mxu0
    %v642 = vpop.f32.mrf.mxu0
    %v643 = vpop.f32.mrf.mxu0
    %644 = vdwg.mxu0
    %v645 = vmax.f32 %v640, 0.0
    %v646 = vpack.c.bf16 %v645, %v645
    %v647 = vld [vmem:[%s3] sm:$0xf]
    %v648 = vld [vmem:[%s3 + $0x4] sm:$0xf]
    %v649 = vld [vmem:[%s3 + $0x8] sm:$0xf]
    %v650 = vld [vmem:[%s3 + $0xc] sm:$0xf]
    %v651 = vld [vmem:[%s3 + $0x10] sm:$0xf]
    %v652 = vld [vmem:[%s3 + $0x14] sm:$0xf]
    %v653 = vld [vmem:[%s3 + $0x18] sm:$0xf]
    %v654 = vld [vmem:[%s3 + $0x1c] sm:$0xf]
    %v655 = vld [vmem:[%s3 + $0x20] sm:$0xf]
    %v656 = vld [vmem:[%s3 + $0x24] sm:$0xf]
    %v657 = vld [vmem:[%s3 + $0x28] sm:$0xf]
    %v658 = vld [vmem:[%s3 + $0x2c] sm:$0xf]
    %v659 = vld [vmem:[%s3 + $0x30] sm:$0x1]
    %v673 = vunpack.c.l.b16 %v647
    %v674 = vunpack.c.l.b16 %v648
    %v675 = vunpack.c.l.b16 %v649
    %v676 = vunpack.c.l.b16 %v650
    %v677 = vunpack.c.l.b16 %v651
    %v678 = vunpack.c.l.b16 %v652
    %v679 = vunpack.c.l.b16 %v653
    %v680 = vunpack.c.l.b16 %v654
    %v681 = vunpack.c.l.b16 %v655
    %v682 = vunpack.c.l.b16 %v656
    %v683 = vunpack.c.l.b16 %v657
    %v684 = vunpack.c.l.b16 %v658
    %v685 = vunpack.c.l.b16 %v659
    %v686 = vpack.c.b16 %v674, %v673
    %v687 = vpack.c.b16 %v676, %v675
    %v688 = vpack.c.b16 %v678, %v677
    %v689 = vpack.c.b16 %v680, %v679
    %v690 = vpack.c.b16 %v682, %v681
    %v691 = vpack.c.b16 %v684, %v683
    %v692 = vpack.c.b16 %v685, %v685
    %v700 = vsel %vm258, %v646, 0
    %v703 = vand.u32 %v692, %v264
    %705 = vmatprep.subr.bf16.mxu0 0
    %706 = vmatpush1.bf16.msra.mxu0 0
    %707 = vmatprep.subr.bf16.mxu0 0
    %708 = vmatpush1.bf16.msra.mxu0 %v703
    %709 = vmatprep.subr.bf16.mxu0 0
    %710 = vmatpush1.bf16.msra.mxu0 %v691
    %711 = vmatprep.subr.bf16.mxu0 0
    %712 = vmatpush1.bf16.msra.mxu0 %v690
    %713 = vmatprep.subr.bf16.mxu0 0
    %714 = vmatpush1.bf16.msra.mxu0 %v689
    %715 = vmatprep.subr.bf16.mxu0 0
    %716 = vmatpush1.bf16.msra.mxu0 %v688
    %717 = vmatprep.subr.bf16.mxu0 0
    %718 = vmatpush1.bf16.msra.mxu0 %v687
    %719 = vmatprep.subr.bf16.mxu0 0
    %720 = vmatpush1.bf16.msra.mxu0 %v686
    %721 = vmatprep.subr.bf16.mxu0 0
    %722 = vmatpush2.bf16.msra.mxu0 0
    %723 = vmatprep.subr.bf16.mxu0 0
    %724 = vmatpush2.bf16.msra.mxu0 0
    %725 = vmatprep.subr.bf16.mxu0 0
    %726 = vmatpush2.bf16.msra.mxu0 0
    %727 = vmatprep.subr.bf16.mxu0 0
    %728 = vmatpush2.bf16.msra.mxu0 0
    %729 = vmatprep.subr.bf16.mxu0 0
    %730 = vmatpush2.bf16.msra.mxu0 0
    %731 = vmatprep.subr.bf16.mxu0 0
    %732 = vmatpush2.bf16.msra.mxu0 0
    %733 = vmatprep.subr.bf16.mxu0 0
    %734 = vmatpush2.bf16.msra.mxu0 0
    %735 = vmatprep.subr.bf16.mxu0 0
    %736 = vmatpush2.bf16.msra.mxu0 0
    %737 = vmatprep.mubr.bf16.mxu0 0
    %738 = vmatmul.mubr.bf16.gmra.mxu0 %v700
    %v739 = vpop.f32.mrf.mxu0
    %v740 = vadd.f32 0.0, %v739
    %v741 = vpop.f32.mrf.mxu0
    %v742 = vpop.f32.mrf.mxu0
    %v743 = vpop.f32.mrf.mxu0
    %744 = vdwg.mxu0
    %v745 = vmax.f32 %v740, 0.0
    %v746 = vpack.c.bf16 %v745, %v745
    %v747 = vld [vmem:[%s4] sm:$0xf]
    %v748 = vld [vmem:[%s4 + $0x4] sm:$0xf]
    %v749 = vld [vmem:[%s4 + $0x8] sm:$0x1]
    %v753 = vunpack.c.l.b16 %v747
    %v754 = vunpack.c.l.b16 %v748
    %v755 = vunpack.c.l.b16 %v749
    %v756 = vpack.c.b16 %v754, %v753
    %v757 = vpack.c.b16 %v755, %v755
    %vm759 = vcmask 138240
    %v761 = vsel %vm759, %v746, 0
    %v764 = vand.u32 %v757, %v264
    %766 = vmatprep.subr.bf16.mxu0 0
    %767 = vmatpush1.bf16.msra.mxu0 0
    %768 = vmatprep.subr.bf16.mxu0 0
    %769 = vmatpush1.bf16.msra.mxu0 0
    %770 = vmatprep.subr.bf16.mxu0 0
    %771 = vmatpush1.bf16.msra.mxu0 0
    %772 = vmatprep.subr.bf16.mxu0 0
    %773 = vmatpush1.bf16.msra.mxu0 0
    %774 = vmatprep.subr.bf16.mxu0 0
    %775 = vmatpush1.bf16.msra.mxu0 0
    %776 = vmatprep.subr.bf16.mxu0 0
    %777 = vmatpush1.bf16.msra.mxu0 0
    %778 = vmatprep.subr.bf16.mxu0 0
    %779 = vmatpush1.bf16.msra.mxu0 %v764
    %780 = vmatprep.subr.bf16.mxu0 0
    %781 = vmatpush1.bf16.msra.mxu0 %v756
    %782 = vmatprep.subr.bf16.mxu0 0
    %783 = vmatpush2.bf16.msra.mxu0 0
    %784 = vmatprep.subr.bf16.mxu0 0
    %785 = vmatpush2.bf16.msra.mxu0 0
    %786 = vmatprep.subr.bf16.mxu0 0
    %787 = vmatpush2.bf16.msra.mxu0 0
    %788 = vmatprep.subr.bf16.mxu0 0
    %789 = vmatpush2.bf16.msra.mxu0 0
    %790 = vmatprep.subr.bf16.mxu0 0
    %791 = vmatpush2.bf16.msra.mxu0 0
    %792 = vmatprep.subr.bf16.mxu0 0
    %793 = vmatpush2.bf16.msra.mxu0 0
    %794 = vmatprep.subr.bf16.mxu0 0
    %795 = vmatpush2.bf16.msra.mxu0 0
    %796 = vmatprep.subr.bf16.mxu0 0
    %797 = vmatpush2.bf16.msra.mxu0 0
    %798 = vmatprep.mubr.bf16.mxu0 0
    %799 = vmatmul.mubr.bf16.gmra.mxu0 %v761
    %v800 = vpop.f32.mrf.mxu0
    %v801 = vadd.f32 0.0, %v800
    %v802 = vpop.f32.mrf.mxu0
    %v803 = vpop.f32.mrf.mxu0
    %v804 = vpop.f32.mrf.mxu0
    %805 = vdwg.mxu0
    %vm806 = vcmask 15360
    %807 = vst.msk [vmem:[%s5] sm:$0xff] %vm806, %v801
    // Predicated region
    $region30: #{_forward_impl.1} parent=1 // pred_check
      _
    $region31: #{_forward_impl.1} parent=1 // pred_check_branch
      %809 = sbr.rel (0) target = $region33
    $region32: #{_forward_impl.1} parent=1 // pred_region
      _
    $region33: #{_forward_impl.1} parent=1 // pred_fallthru
      _
    // Predicated region
    $region34: #{_forward_impl.1} parent=1 // pred_check
      _
    $region35: #{_forward_impl.1} parent=1 // pred_check_branch
      %811 = sbr.rel (0) target = $region37
    $region36: #{_forward_impl.1} parent=1 // pred_region
      _
    $region37: #{_forward_impl.1} parent=1 // pred_fallthru
      _
    %812 = vsyncpa [#allocation3], 1
    %813 = vsyncpa [#allocation5], 1

</llo_original>
